<compile_context>
chip_gen: v5e
topology: v5e:2x2
jax: 0.10.0
libtpu: 0.0.40
codegen_flags: <defaults>
</compile_context>

<pallas_src>
from typing import Any

import jax
import jax.numpy as jnp
from jax.experimental import pallas as pl
from jax.experimental.pallas import tpu as pltpu


def _round_up(x: int, m: int) -> int:
    return ((x + m - 1) // m) * m


# ----------------------------------------------------------------------------
# Pallas kernel: tiled fused linear  y = x @ W + b   (f32 accumulation)
# ----------------------------------------------------------------------------
def _linear_kernel(x_ref, w_ref, b_ref, o_ref, acc_ref):
    k = pl.program_id(2)

    @pl.when(k == 0)
    def _():
        acc_ref[...] = jnp.zeros_like(acc_ref)

    acc_ref[...] += jnp.dot(
        x_ref[...], w_ref[...], preferred_element_type=jnp.float32
    )

    @pl.when(k == pl.num_programs(2) - 1)
    def _():
        # Epilogue kept in f32 on the accumulator (v5e has no bf16 VALU);
        # bias is added exactly once, off the K reduction path.
        o_ref[...] = (acc_ref[...] + b_ref[...].astype(jnp.float32)).astype(
            o_ref.dtype
        )


def pallas_linear(
    x: jax.Array,
    w: jax.Array,
    b: jax.Array,
    *,
    tm: int = 256,
    tn: int = 256,
    tk: int = 256,
) -> jax.Array:
    M, K = x.shape
    K2, N = w.shape
    assert K == K2
    out_dtype = x.dtype
    b2d = b.reshape(1, N)

    # bf16 operands into the MXU (f32 accumulation inside the kernel): halves
    # HBM/VMEM traffic for x and W and hits the bf16 MXU peak on all chips.
    x = x.astype(jnp.bfloat16)
    w = w.astype(jnp.bfloat16)

    # Lane/sublane-aligned tiles, capped by the (128-rounded) problem dims.
    tm = min(tm, _round_up(M, 128))
    tn = min(tn, _round_up(N, 128))
    tk = min(tk, _round_up(K, 128))
    Mp, Np, Kp = _round_up(M, tm), _round_up(N, tn), _round_up(K, tk)

    # Zero-pad to tile multiples (zeros contribute nothing to the matmul).
    if (Mp, Kp) != (M, K):
        x = jnp.pad(x, ((0, Mp - M), (0, Kp - K)))
    if (Kp, Np) != (K, N):
        w = jnp.pad(w, ((0, Kp - K), (0, Np - N)))
    if Np != N:
        b2d = jnp.pad(b2d, ((0, 0), (0, Np - N)))

    grid = (Mp // tm, Np // tn, Kp // tk)

    cost = pl.CostEstimate(
        flops=2 * Mp * Kp * Np,
        transcendentals=0,
        bytes_accessed=(
            Mp * Kp * 2
            + Kp * Np * 2
            + Np * 4
            + Mp * Np * jnp.dtype(out_dtype).itemsize
        ),
    )

    out = pl.pallas_call(
        _linear_kernel,
        out_shape=jax.ShapeDtypeStruct((Mp, Np), out_dtype),
        grid_spec=pltpu.PrefetchScalarGridSpec(
            num_scalar_prefetch=0,
            grid=grid,
            in_specs=[
                pl.BlockSpec((tm, tk), lambda i, j, k: (i, k)),
                pl.BlockSpec((tk, tn), lambda i, j, k: (k, j)),
                pl.BlockSpec((1, tn), lambda i, j, k: (0, j)),
            ],
            out_specs=pl.BlockSpec((tm, tn), lambda i, j, k: (i, j)),
            scratch_shapes=[pltpu.VMEM((tm, tn), jnp.float32)],
        ),
        compiler_params=pltpu.CompilerParams(
            dimension_semantics=("parallel", "parallel", "arbitrary"),
            vmem_limit_bytes=32 * 1024 * 1024,  # safe on v5e/v6e/v7x
        ),
        cost_estimate=cost,
    )(x, w, b2d)

    if (Mp, Np) != (M, N):
        out = out[:M, :N]
    return out


# ----------------------------------------------------------------------------
# Synthetic inner "LightningModule": a single Linear layer backed by the kernel
# ----------------------------------------------------------------------------
class SyntheticLightningModule:
    def __init__(self, in_features: int, out_features: int, key: jax.Array):
        kw, kb = jax.random.split(key)
        # Deterministic, in-script parameter init (no checkpoint loading).
        self.weight = (
            jax.random.normal(kw, (in_features, out_features), jnp.float32) * 0.02
        )
        # Bias stored as (1, F_out): reshape hoisted out of the per-call path.
        self.bias = (
            jax.random.normal(kb, (1, out_features), jnp.float32) * 0.02
        )
        self._ddp_params_and_buffers_to_ignore = ["bias"]
        # jit so the pallas_call is traced/lowered once, not per call.
        self._jit_forward = jax.jit(pallas_linear)

    def forward(self, x: jax.Array) -> jax.Array:
        return self._jit_forward(x, self.weight, self.bias)

    def __call__(self, *args: Any, **kwargs: Any) -> Any:
        return self.forward(*args, **kwargs)


# ----------------------------------------------------------------------------
# The wrapper, mirroring _LightningPrecisionModuleWrapperBase semantics
# ----------------------------------------------------------------------------
class LightningPrecisionModuleWrapperBase:
    def __init__(self, pl_module: SyntheticLightningModule) -> None:
        self.module = pl_module
        _ignore = getattr(pl_module, "_ddp_params_and_buffers_to_ignore", [])
        self._ddp_params_and_buffers_to_ignore = [f"module.{p}" for p in _ignore]

    # Base-class semantics: these all raise NotImplementedError.
    def training_step(self, *args: Any, **kwargs: Any) -> Any:
        raise NotImplementedError

    def validation_step(self, *args: Any, **kwargs: Any) -> Any:
        raise NotImplementedError

    def test_step(self, *args: Any, **kwargs: Any) -> Any:
        raise NotImplementedError

    def predict_step(self, *args: Any, **kwargs: Any) -> Any:
        raise NotImplementedError

    def forward(self, *args: Any, **kwargs: Any) -> Any:
        # TODO(synk): base-class forward raises NotImplementedError; concrete
        # precision wrappers delegate to self.module — exposed via __call__.
        raise NotImplementedError

    def __call__(self, *args: Any, **kwargs: Any) -> Any:
        # Delegation path used by concrete subclasses (the wrapped module's
        # forward, whose hot path is the Pallas kernel above).
        return self.module(*args, **kwargs)


if __name__ == "__main__":
    key = jax.random.PRNGKey(0)
    k_mod, k_x = jax.random.split(key)

    # Small but lane-aligned shapes: with 128 tiles this gives a (2, 2, 3)
    # grid, exercising the pipelined K accumulation and parallel M/N axes
    # while keeping compile + run time minimal.
    B, F_in, F_out = 256, 384, 256
    inner = SyntheticLightningModule(F_in, F_out, k_mod)
    wrapper = LightningPrecisionModuleWrapperBase(inner)

    x = jax.random.normal(k_x, (B, F_in), jnp.float32)

    # Verify the base-class contract: forward()/steps raise NotImplementedError.
    for meth in (
        "forward",
        "training_step",
        "validation_step",
        "test_step",
        "predict_step",
    ):
        try:
            getattr(wrapper, meth)(x)
            raise AssertionError(f"{meth} should have raised NotImplementedError")
        except NotImplementedError:
            pass

    # Verify DDP ignore-list prefixing semantics.
    assert wrapper._ddp_params_and_buffers_to_ignore == ["module.bias"]

    # Delegated forward through the wrapper (Pallas kernel hot path), using
    # 128-sized tiles for the small demo problem.
    y = jax.jit(
        lambda xx, ww, bb: pallas_linear(xx, ww, bb, tm=128, tn=128, tk=128)
    )(x, inner.weight, inner.bias)
    y = jax.block_until_ready(y)
    assert y.shape == (B, F_out)
    assert y.dtype == x.dtype

    # Also exercise the module's default jitted path once (default tiles).
    y2 = jax.block_until_ready(wrapper(x))
    assert y2.shape == (B, F_out)

    # Reference with the same bf16 operands + f32 accumulation as the kernel.
    y_ref = (
        jnp.dot(
            x.astype(jnp.bfloat16),
            inner.weight.astype(jnp.bfloat16),
            preferred_element_type=jnp.float32,
        )
        + inner.bias
    ).astype(x.dtype)
    assert jnp.allclose(y, y_ref, atol=2e-3, rtol=2e-3)
    assert jnp.allclose(y2, y_ref, atol=2e-3, rtol=2e-3)

    # Loose check against the full-f32 reference (bf16 operand rounding only).
    y_ref_f32 = x @ inner.weight + inner.bias
    assert jnp.allclose(y, y_ref_f32, atol=5e-2, rtol=5e-2)

    print("KERNEL_OK")
</pallas_src>

<mosaic_0001>
module attributes {stable_mosaic.version = 11 : i64} {
  func.func @_linear_kernel(%arg0: i32, %arg1: i32, %arg2: i32, %arg3: memref<128x128xbf16, #tpu.memory_space<vmem>>, %arg4: memref<128x128xbf16, #tpu.memory_space<vmem>>, %arg5: memref<1x128xf32, #tpu.memory_space<vmem>>, %arg6: memref<128x128xf32, #tpu.memory_space<vmem>>, %arg7: memref<128x128xf32, #tpu.memory_space<vmem>>) attributes {dimension_semantics = [#tpu.dimension_semantics<parallel>, #tpu.dimension_semantics<parallel>, #tpu.dimension_semantics<arbitrary>], iteration_bounds = array<i64: 2, 2, 3>, scalar_prefetch = 0 : i64, scratch_operands = 1 : i64, tpu.core_type = #tpu.core_type<tc>, window_params = [{transform_indices = @transform_0, window_bounds = array<i64: 128, 128>}, {transform_indices = @transform_1, window_bounds = array<i64: 128, 128>}, {transform_indices = @transform_2, window_bounds = array<i64: 1, 128>}, {transform_indices = @transform_3, window_bounds = array<i64: 128, 128>}]} {
    %c0_i32 = arith.constant 0 : i32
    %0 = arith.cmpi eq, %arg2, %c0_i32 : i32
    %1 = arith.extui %0 : i1 to i32
    %c0_i32_0 = arith.constant 0 : i32
    %2 = arith.cmpi ne, %1, %c0_i32_0 : i32
    scf.if %2 {
      %cst_9 = arith.constant 0.000000e+00 : f32
      %12 = vector.broadcast %cst_9 : f32 to vector<128x128xf32>
      %c0_10 = arith.constant 0 : index
      %c0_11 = arith.constant 0 : index
      %13 = vector.load %arg7[%c0_10, %c0_11] : memref<128x128xf32, #tpu.memory_space<vmem>>, vector<128x128xf32>
      tpu.vector_store %arg7[%c0_10, %c0_11], %12 {strides = array<i32>} : memref<128x128xf32, #tpu.memory_space<vmem>>, vector<128x128xf32>,
    } else {
    }
    %c0 = arith.constant 0 : index
    %c0_1 = arith.constant 0 : index
    %3 = vector.load %arg7[%c0, %c0_1] : memref<128x128xf32, #tpu.memory_space<vmem>>, vector<128x128xf32>
    %c0_2 = arith.constant 0 : index
    %c0_3 = arith.constant 0 : index
    %4 = vector.load %arg3[%c0_2, %c0_3] : memref<128x128xbf16, #tpu.memory_space<vmem>>, vector<128x128xbf16>
    %c0_4 = arith.constant 0 : index
    %c0_5 = arith.constant 0 : index
    %5 = vector.load %arg4[%c0_4, %c0_5] : memref<128x128xbf16, #tpu.memory_space<vmem>>, vector<128x128xbf16>
    %cst = arith.constant dense<0.000000e+00> : vector<128x128xf32>
    %6 = tpu.matmul %4, %5, %cst {dimension_numbers = #tpu.dot_dimension_numbers<[1], [0], [0], [1], [0, 0, 1, 1], [], []>} : vector<128x128xbf16>, vector<128x128xbf16>, vector<128x128xf32> -> vector<128x128xf32>
    %7 = arith.addf %3, %6 : vector<128x128xf32>
    %c0_6 = arith.constant 0 : index
    %c0_7 = arith.constant 0 : index
    %8 = vector.load %arg7[%c0_6, %c0_7] : memref<128x128xf32, #tpu.memory_space<vmem>>, vector<128x128xf32>
    tpu.vector_store %arg7[%c0_6, %c0_7], %7 {strides = array<i32>} : memref<128x128xf32, #tpu.memory_space<vmem>>, vector<128x128xf32>,
    %c2_i32 = arith.constant 2 : i32
    %9 = arith.cmpi eq, %arg2, %c2_i32 : i32
    %10 = arith.extui %9 : i1 to i32
    %c0_i32_8 = arith.constant 0 : i32
    %11 = arith.cmpi ne, %10, %c0_i32_8 : i32
    scf.if %11 {
      %c0_9 = arith.constant 0 : index
      %c0_10 = arith.constant 0 : index
      %12 = vector.load %arg7[%c0_9, %c0_10] : memref<128x128xf32, #tpu.memory_space<vmem>>, vector<128x128xf32>
      %c0_11 = arith.constant 0 : index
      %c0_12 = arith.constant 0 : index
      %13 = vector.load %arg5[%c0_11, %c0_12] : memref<1x128xf32, #tpu.memory_space<vmem>>, vector<1x128xf32>
      %14 = vector.broadcast %13 : vector<1x128xf32> to vector<128x128xf32>
      %15 = arith.addf %12, %14 : vector<128x128xf32>
      %c0_13 = arith.constant 0 : index
      %c0_14 = arith.constant 0 : index
      %16 = vector.load %arg6[%c0_13, %c0_14] : memref<128x128xf32, #tpu.memory_space<vmem>>, vector<128x128xf32>
      tpu.vector_store %arg6[%c0_13, %c0_14], %15 {strides = array<i32>} : memref<128x128xf32, #tpu.memory_space<vmem>>, vector<128x128xf32>,
    } else {
    }
    return
  }
  func.func @transform_0(%arg0: i32, %arg1: i32, %arg2: i32) -> (i32, i32) {
    %c0_i32 = arith.constant 0 : i32
    return %arg0, %arg2 : i32, i32
  }
  func.func @transform_1(%arg0: i32, %arg1: i32, %arg2: i32) -> (i32, i32) {
    %c0_i32 = arith.constant 0 : i32
    return %arg2, %arg1 : i32, i32
  }
  func.func @transform_2(%arg0: i32, %arg1: i32, %arg2: i32) -> (i32, i32) {
    %c0_i32 = arith.constant 0 : i32
    %c0_i32_0 = arith.constant 0 : i32
    return %c0_i32, %arg1 : i32, i32
  }
  func.func @transform_3(%arg0: i32, %arg1: i32, %arg2: i32) -> (i32, i32) {
    %c0_i32 = arith.constant 0 : i32
    return %arg0, %arg1 : i32, i32
  }
}

</mosaic_0001>

<llo_original>
// kernel: _lambda_.1
$region0: #{_lambda_.1}
  #allocation0 [shape = 'u32[]', space=smem, size = 0x4, offset = 0x4, fixed_abs, tag = 'smem constant byte address 0x4 - core index']
  #allocation1 [shape = 'u32[72,128]{1,0:T(1,128)}', space=vmem, size = 0x9000, scoped, tag = 'internal scratch']
  #allocation2 [shape = 'f32[128,128]{1,0:T(8,128)}', space=vmem, size = 0x10000, scoped, tag = 'scratch operand']
  %s0 = inlined_call_operand.vmem [shape: bf16[256,384], index: 0, kind: input, shape index: {}]
  %s1 = inlined_call_operand.vmem [shape: bf16[384,256], index: 1, kind: input, shape index: {}]
  %s2 = inlined_call_operand.vmem [shape: f32[1,256], index: 2, kind: input, shape index: {}]
  %s3 = inlined_call_operand.hbm [shape: f32[256,256], index: 3, kind: output, shape index: {}]
  %s4 = sld [smem:[#allocation0]]
  $region135: #{_lambda_.1} parent=0
    _
  %s6 = ssub.s32 1, %s4
  %s7 = scalar_select 0, %s6, %s4
  $region1: #{_lambda_.1} parent=0
    #allocation3 [shape = 'u8[65536]{0}', space=vmem, size = 0x10000, scoped, tag = 'input window, operand 0']
    #allocation4 [shape = 'u8[65536]{0}', space=vmem, size = 0x10000, scoped, tag = 'input window, operand 1']
    #allocation5 [shape = 'u8[131072]{0}', space=vmem, size = 0x20000, scoped, tag = 'output window, operand 0']
    #allocation6 [shape = 's32[2]{0}', space=sflag, size = 0x8, scoped, tag = 'scoped memory for _lambda_.1']
    %8 = vsyncpa [#allocation6], 0
    %s9 = scalar_lea.sflag [#allocation6], 1
    %10 = vsyncpa %s9, 0
    loop: start=0, step=1, limit=14
    $region2: #{_lambda_.1} parent=1 // loop_pre_header
      _
    $region3: #{_lambda_.1} parent=1 // loop_header
      %s12 = sphi 0, %s16
      %p13 = scmp.ge.s32.totalorder %s12, 14
      %s19 = sphi 0, %s38
      %s20 = sphi 0, %s34
      %s21 = sphi 0, %s30
      %s22 = sphi 0, %s19
      %s23 = sphi 0, %s20
      %s24 = sphi 0, %s21
      %s25 = sphi 0, %s22
      %s26 = sphi 0, %s23
      %s27 = sphi 0, %s24
      %s43 = sphi 0, %s45
      %s46 = sphi 0, %s43
      %s47 = sphi 0, %s46
      %s63 = sphi 0, %s47
      %s71 = sphi 0, %s73
      %s74 = sphi 0, %s71
      %s75 = sphi 0, %s74
      %s91 = sphi 0, %s75
      %s97 = sphi 0, %s99
      %s100 = sphi 0, %s97
      %s101 = sphi 0, %s100
      %s117 = sphi 0, %s101
      %s125 = sphi 0, %s127
      %s128 = sphi 0, %s125
      %s129 = sphi 0, %s128
      %s145 = sphi 0, %s129
    $region4: #{_lambda_.1} parent=1 // loop_header_branch
      %15 = sbr.rel (%p13) target = $region8
    $region5: #{_lambda_.1} parent=1 // loop_body
      %s17 = ssub.s32 %s12, 1
      %s18 = ssub.s32 %s12, 2
      %s28 = sadd.s32 1, %s21
      %p29 = scmp.ge.s32.totalorder %s28, 3
      %s30 = scalar_select %p29, 0, %s28
      %s31 = sadd.s32 1, %s20
      %s32 = scalar_select %p29, %s31, %s20
      %p33 = scmp.ge.s32.totalorder %s32, 2
      %s34 = scalar_select %p33, 0, %s32
      %s35 = sadd.s32 1, %s19
      %s36 = scalar_select %p33, %s35, %s19
      %p37 = scmp.ge.s32.totalorder %s36, 2
      %s38 = scalar_select %p37, 0, %s36
      %s39 = ssub.s32 %s19, %s38
      %s40 = ssub.s32 %s21, %s30
      %s41 = sor.u32 %s39, %s40
      %p42 = scmp.eq.s32.totalorder %s41, 0
      %s44 = sadd.s32 %s43, 1
      %s45 = scalar_select %p42, %s43, %s44
      %p48 = pneg %p42
      %p49 = scmp.eq.s32.totalorder %s12, 11
      %p50 = por %p48, %p49
      %p51 = scmp.ne.s32.totalorder %s43, %s46
      %p52 = scmp.eq.s32.totalorder %s12, 0
      %p53 = por %p51, %p52
      %p54 = scmp.ne.s32.totalorder %s43, %s46
      %p55 = scmp.eq.s32.totalorder %s17, 11
      %p56 = por %p54, %p55
      %p57 = scmp.ne.s32.totalorder %s46, %s47
      %p58 = scmp.eq.s32.totalorder %s17, 0
      %p59 = por %p57, %p58
      %p60 = scmp.ne.s32.totalorder %s46, %s47
      %p61 = scmp.eq.s32.totalorder %s18, 11
      %p62 = por %p60, %p61
      %p64 = scmp.ne.s32.totalorder %s47, %s63
      %p65 = scmp.eq.s32.totalorder %s18, 0
      %p66 = por %p64, %p65
      %s67 = ssub.s32 %s21, %s30
      %s68 = ssub.s32 %s20, %s34
      %s69 = sor.u32 %s67, %s68
      %p70 = scmp.eq.s32.totalorder %s69, 0
      %s72 = sadd.s32 %s71, 1
      %s73 = scalar_select %p70, %s71, %s72
      %p76 = pneg %p70
      %p77 = scmp.eq.s32.totalorder %s12, 11
      %p78 = por %p76, %p77
      %p79 = scmp.ne.s32.totalorder %s71, %s74
      %p80 = scmp.eq.s32.totalorder %s12, 0
      %p81 = por %p79, %p80
      %p82 = scmp.ne.s32.totalorder %s71, %s74
      %p83 = scmp.eq.s32.totalorder %s17, 11
      %p84 = por %p82, %p83
      %p85 = scmp.ne.s32.totalorder %s74, %s75
      %p86 = scmp.eq.s32.totalorder %s17, 0
      %p87 = por %p85, %p86
      %p88 = scmp.ne.s32.totalorder %s74, %s75
      %p89 = scmp.eq.s32.totalorder %s18, 11
      %p90 = por %p88, %p89
      %p92 = scmp.ne.s32.totalorder %s75, %s91
      %p93 = scmp.eq.s32.totalorder %s18, 0
      %p94 = por %p92, %p93
      %s95 = ssub.s32 %s20, %s34
      %p96 = scmp.eq.s32.totalorder %s95, 0
      %s98 = sadd.s32 %s97, 1
      %s99 = scalar_select %p96, %s97, %s98
      %p102 = pneg %p96
      %p103 = scmp.eq.s32.totalorder %s12, 11
      %p104 = por %p102, %p103
      %p105 = scmp.ne.s32.totalorder %s97, %s100
      %p106 = scmp.eq.s32.totalorder %s12, 0
      %p107 = por %p105, %p106
      %p108 = scmp.ne.s32.totalorder %s97, %s100
      %p109 = scmp.eq.s32.totalorder %s17, 11
      %p110 = por %p108, %p109
      %p111 = scmp.ne.s32.totalorder %s100, %s101
      %p112 = scmp.eq.s32.totalorder %s17, 0
      %p113 = por %p111, %p112
      %p114 = scmp.ne.s32.totalorder %s100, %s101
      %p115 = scmp.eq.s32.totalorder %s18, 11
      %p116 = por %p114, %p115
      %p118 = scmp.ne.s32.totalorder %s101, %s117
      %p119 = scmp.eq.s32.totalorder %s18, 0
      %p120 = por %p118, %p119
      %s121 = ssub.s32 %s19, %s38
      %s122 = ssub.s32 %s20, %s34
      %s123 = sor.u32 %s121, %s122
      %p124 = scmp.eq.s32.totalorder %s123, 0
      %s126 = sadd.s32 %s125, 1
      %s127 = scalar_select %p124, %s125, %s126
      %p130 = pneg %p124
      %p131 = scmp.eq.s32.totalorder %s12, 11
      %p132 = por %p130, %p131
      %p133 = scmp.ne.s32.totalorder %s125, %s128
      %p134 = scmp.eq.s32.totalorder %s12, 0
      %p135 = por %p133, %p134
      %p136 = scmp.ne.s32.totalorder %s125, %s128
      %p137 = scmp.eq.s32.totalorder %s17, 11
      %p138 = por %p136, %p137
      %p139 = scmp.ne.s32.totalorder %s128, %s129
      %p140 = scmp.eq.s32.totalorder %s17, 0
      %p141 = por %p139, %p140
      %p142 = scmp.ne.s32.totalorder %s128, %s129
      %p143 = scmp.eq.s32.totalorder %s18, 11
      %p144 = por %p142, %p143
      %p146 = scmp.ne.s32.totalorder %s129, %s145
      %p147 = scmp.eq.s32.totalorder %s18, 0
      %p148 = por %p146, %p147
      %p149 = scmp.le.s32.totalorder 1, %s12
      %p150 = scmp.lt.s32.totalorder %s12, 13
      %p151 = pnand %p149, %p150
      %p152 = pneg %p151
      // Predicated region
      $region9: #{_lambda_.1} parent=5 // pred_check
        _
      $region10: #{_lambda_.1} parent=5 // pred_check_branch
        %154 = sbr.rel (%p151) target = $region12
      $region11: #{_lambda_.1} parent=5 // pred_region
        %s155 = ssub.s32 %s12, 1
      $region12: #{_lambda_.1} parent=5 // pred_fallthru
        _
      %p156 = scmp.lt.s32.totalorder %s12, 12
      // Predicated region
      $region13: #{_lambda_.1} parent=5 // pred_check
        %p157 = pneg %p156
      $region14: #{_lambda_.1} parent=5 // pred_check_branch
        %159 = sbr.rel (%p157) target = $region16
      $region15: #{_lambda_.1} parent=5 // pred_region
        // Predicated region
        $region17: #{_lambda_.1} parent=15 // pred_check
          %p160 = pneg %p53
        $region18: #{_lambda_.1} parent=15 // pred_check_branch
          %162 = sbr.rel (%p160) target = $region20
        $region19: #{_lambda_.1} parent=15 // pred_region
          %s163 = sand.u32 %s43, 1
          %s164 = sand.u32 %s43, 1
          %s165 = smul.addr %s164, 64
          %s166 = scalar_lea.vmem [#allocation3], %s165
          %s167 = smul.u32 16, %s19
          %s168 = smul.addr %s167, 3
          %s169 = sadd.s32 %s21, %s168
          %s170 = smul.addr %s169, 4
          %s171 = scalar_lea.vmem %s0, %s170
          // Predicated region
          $region21: #{_lambda_.1} parent=19 // pred_check
            _
          $region22: #{_lambda_.1} parent=19 // pred_check_branch
            %173 = sbr.rel (0) target = $region24
          $region23: #{_lambda_.1} parent=19 // pred_region
            // Predicated region
            $region25: #{_lambda_.1} parent=23 // pred_check
              _
            $region26: #{_lambda_.1} parent=23 // pred_check_branch
              %175 = sbr.rel target = $region28
            $region27: #{_lambda_.1} parent=23 // pred_region
              // Predicated region
              $region40: #{_lambda_.1} parent=27 // pred_check
                _
              $region41: #{_lambda_.1} parent=27 // pred_check_branch
                %221 = sbr.rel (0) target = $region43
              $region42: #{_lambda_.1} parent=27 // pred_region
                loop: start=0, step=1, limit=1
                $region44: #{_lambda_.1} parent=42 // loop_pre_header
                  _
                $region45: #{_lambda_.1} parent=42 // loop_header
                  %s223 = sphi 0, %s227
                  %p224 = scmp.ge.s32.totalorder %s223, 1
                  %s228 = sphi %s171, %s171
                  %s229 = sphi %s166, %s166
                $region46: #{_lambda_.1} parent=42 // loop_header_branch
                  %226 = sbr.rel (%p224) target = $region50
                $region47: #{_lambda_.1} parent=42 // loop_body
                  _
                $region48: #{_lambda_.1} parent=42 // loop_footer
                  %s227 = sadd.s32 1, %s223
                $region49: #{_lambda_.1} parent=42 // loop_footer_branch
                  %222 = sbr.rel target = $region45
                $region50: #{_lambda_.1} parent=42 // loop_exit
                  _
                %s231 = ssub.s32 16, 1
                loop: start=0, step=1, limit=1
                $region51: #{_lambda_.1} parent=42 // loop_pre_header
                  _
                $region52: #{_lambda_.1} parent=42 // loop_header
                  %s233 = sphi 0, %s237
                  %p234 = scmp.ge.s32.totalorder %s233, 1
                  %s238 = sphi %s171, %s171
                  %s239 = sphi %s166, %s166
                $region53: #{_lambda_.1} parent=42 // loop_header_branch
                  %236 = sbr.rel (%p234) target = $region57
                $region54: #{_lambda_.1} parent=42 // loop_body
                  %v240 = vld [vmem:[%s238] sm:%s231]
                  %241 = vst [vmem:[%s239] sm:%s231] %v240
                  %v242 = vld [vmem:[%s238 + $0xc] sm:%s231]
                  %243 = vst [vmem:[%s239 + $0x4] sm:%s231] %v242
                  %v244 = vld [vmem:[%s238 + $0x18] sm:%s231]
                  %245 = vst [vmem:[%s239 + $0x8] sm:%s231] %v244
                  %v246 = vld [vmem:[%s238 + $0x24] sm:%s231]
                  %247 = vst [vmem:[%s239 + $0xc] sm:%s231] %v246
                  %v248 = vld [vmem:[%s238 + $0x30] sm:%s231]
                  %249 = vst [vmem:[%s239 + $0x10] sm:%s231] %v248
                  %v250 = vld [vmem:[%s238 + $0x3c] sm:%s231]
                  %251 = vst [vmem:[%s239 + $0x14] sm:%s231] %v250
                  %v252 = vld [vmem:[%s238 + $0x48] sm:%s231]
                  %253 = vst [vmem:[%s239 + $0x18] sm:%s231] %v252
                  %v254 = vld [vmem:[%s238 + $0x54] sm:%s231]
                  %255 = vst [vmem:[%s239 + $0x1c] sm:%s231] %v254
                  %v256 = vld [vmem:[%s238 + $0x60] sm:%s231]
                  %257 = vst [vmem:[%s239 + $0x20] sm:%s231] %v256
                  %v258 = vld [vmem:[%s238 + $0x6c] sm:%s231]
                  %259 = vst [vmem:[%s239 + $0x24] sm:%s231] %v258
                  %v260 = vld [vmem:[%s238 + $0x78] sm:%s231]
                  %261 = vst [vmem:[%s239 + $0x28] sm:%s231] %v260
                  %v262 = vld [vmem:[%s238 + $0x84] sm:%s231]
                  %263 = vst [vmem:[%s239 + $0x2c] sm:%s231] %v262
                  %v264 = vld [vmem:[%s238 + $0x90] sm:%s231]
                  %265 = vst [vmem:[%s239 + $0x30] sm:%s231] %v264
                  %v266 = vld [vmem:[%s238 + $0x9c] sm:%s231]
                  %267 = vst [vmem:[%s239 + $0x34] sm:%s231] %v266
                  %v268 = vld [vmem:[%s238 + $0xa8] sm:%s231]
                  %269 = vst [vmem:[%s239 + $0x38] sm:%s231] %v268
                  %v270 = vld [vmem:[%s238 + $0xb4] sm:%s231]
                  %271 = vst [vmem:[%s239 + $0x3c] sm:%s231] %v270
                $region55: #{_lambda_.1} parent=42 // loop_footer
                  %s237 = sadd.s32 1, %s233
                $region56: #{_lambda_.1} parent=42 // loop_footer_branch
                  %232 = sbr.rel target = $region52
                $region57: #{_lambda_.1} parent=42 // loop_exit
                  _
              $region43: #{_lambda_.1} parent=27 // pred_fallthru
                _
            $region28: #{_lambda_.1} parent=23 // pred_fallthru
              _
            // Predicated region
            $region29: #{_lambda_.1} parent=23 // pred_check
              _
            $region30: #{_lambda_.1} parent=23 // pred_check_branch
              %177 = sbr.rel (0) target = $region32
            $region31: #{_lambda_.1} parent=23 // pred_region
              %s179 = ssub.s32 16, 1
              loop: start=0, step=1, limit=1
              $region33: #{_lambda_.1} parent=31 // loop_pre_header
                _
              $region34: #{_lambda_.1} parent=31 // loop_header
                %s181 = sphi 0, %s185
                %p182 = scmp.ge.s32.totalorder %s181, 1
                %s186 = sphi %s171, %s171
                %s187 = sphi %s166, %s166
              $region35: #{_lambda_.1} parent=31 // loop_header_branch
                %184 = sbr.rel (%p182) target = $region39
              $region36: #{_lambda_.1} parent=31 // loop_body
                %v188 = vld [vmem:[%s186] sm:%s179]
                %189 = vst [vmem:[%s187] sm:%s179] %v188
                %v190 = vld [vmem:[%s186 + $0xc] sm:%s179]
                %191 = vst [vmem:[%s187 + $0x4] sm:%s179] %v190
                %v192 = vld [vmem:[%s186 + $0x18] sm:%s179]
                %193 = vst [vmem:[%s187 + $0x8] sm:%s179] %v192
                %v194 = vld [vmem:[%s186 + $0x24] sm:%s179]
                %195 = vst [vmem:[%s187 + $0xc] sm:%s179] %v194
                %v196 = vld [vmem:[%s186 + $0x30] sm:%s179]
                %197 = vst [vmem:[%s187 + $0x10] sm:%s179] %v196
                %v198 = vld [vmem:[%s186 + $0x3c] sm:%s179]
                %199 = vst [vmem:[%s187 + $0x14] sm:%s179] %v198
                %v200 = vld [vmem:[%s186 + $0x48] sm:%s179]
                %201 = vst [vmem:[%s187 + $0x18] sm:%s179] %v200
                %v202 = vld [vmem:[%s186 + $0x54] sm:%s179]
                %203 = vst [vmem:[%s187 + $0x1c] sm:%s179] %v202
                %v204 = vld [vmem:[%s186 + $0x60] sm:%s179]
                %205 = vst [vmem:[%s187 + $0x20] sm:%s179] %v204
                %v206 = vld [vmem:[%s186 + $0x6c] sm:%s179]
                %207 = vst [vmem:[%s187 + $0x24] sm:%s179] %v206
                %v208 = vld [vmem:[%s186 + $0x78] sm:%s179]
                %209 = vst [vmem:[%s187 + $0x28] sm:%s179] %v208
                %v210 = vld [vmem:[%s186 + $0x84] sm:%s179]
                %211 = vst [vmem:[%s187 + $0x2c] sm:%s179] %v210
                %v212 = vld [vmem:[%s186 + $0x90] sm:%s179]
                %213 = vst [vmem:[%s187 + $0x30] sm:%s179] %v212
                %v214 = vld [vmem:[%s186 + $0x9c] sm:%s179]
                %215 = vst [vmem:[%s187 + $0x34] sm:%s179] %v214
                %v216 = vld [vmem:[%s186 + $0xa8] sm:%s179]
                %217 = vst [vmem:[%s187 + $0x38] sm:%s179] %v216
                %v218 = vld [vmem:[%s186 + $0xb4] sm:%s179]
                %219 = vst [vmem:[%s187 + $0x3c] sm:%s179] %v218
              $region37: #{_lambda_.1} parent=31 // loop_footer
                %s185 = sadd.s32 1, %s181
              $region38: #{_lambda_.1} parent=31 // loop_footer_branch
                %180 = sbr.rel target = $region34
              $region39: #{_lambda_.1} parent=31 // loop_exit
                _
            $region32: #{_lambda_.1} parent=23 // pred_fallthru
              _
          $region24: #{_lambda_.1} parent=19 // pred_fallthru
            _
          %272 = vnop
        $region20: #{_lambda_.1} parent=15 // pred_fallthru
          _
        // Predicated region
        $region58: #{_lambda_.1} parent=15 // pred_check
          %p273 = pneg %p81
        $region59: #{_lambda_.1} parent=15 // pred_check_branch
          %275 = sbr.rel (%p273) target = $region61
        $region60: #{_lambda_.1} parent=15 // pred_region
          %s276 = sand.u32 %s71, 1
          %s277 = sand.u32 %s71, 1
          %s278 = smul.addr %s277, 64
          %s279 = scalar_lea.vmem [#allocation4], %s278
          %s280 = smul.u32 16, %s21
          %s281 = smul.addr %s280, 2
          %s282 = sadd.s32 %s20, %s281
          %s283 = smul.addr %s282, 4
          %s284 = scalar_lea.vmem %s1, %s283
          // Predicated region
          $region62: #{_lambda_.1} parent=60 // pred_check
            _
          $region63: #{_lambda_.1} parent=60 // pred_check_branch
            %286 = sbr.rel (0) target = $region65
          $region64: #{_lambda_.1} parent=60 // pred_region
            // Predicated region
            $region66: #{_lambda_.1} parent=64 // pred_check
              _
            $region67: #{_lambda_.1} parent=64 // pred_check_branch
              %288 = sbr.rel target = $region69
            $region68: #{_lambda_.1} parent=64 // pred_region
              // Predicated region
              $region81: #{_lambda_.1} parent=68 // pred_check
                _
              $region82: #{_lambda_.1} parent=68 // pred_check_branch
                %334 = sbr.rel (0) target = $region84
              $region83: #{_lambda_.1} parent=68 // pred_region
                loop: start=0, step=1, limit=1
                $region85: #{_lambda_.1} parent=83 // loop_pre_header
                  _
                $region86: #{_lambda_.1} parent=83 // loop_header
                  %s336 = sphi 0, %s340
                  %p337 = scmp.ge.s32.totalorder %s336, 1
                  %s341 = sphi %s284, %s284
                  %s342 = sphi %s279, %s279
                $region87: #{_lambda_.1} parent=83 // loop_header_branch
                  %339 = sbr.rel (%p337) target = $region91
                $region88: #{_lambda_.1} parent=83 // loop_body
                  _
                $region89: #{_lambda_.1} parent=83 // loop_footer
                  %s340 = sadd.s32 1, %s336
                $region90: #{_lambda_.1} parent=83 // loop_footer_branch
                  %335 = sbr.rel target = $region86
                $region91: #{_lambda_.1} parent=83 // loop_exit
                  _
                %s344 = ssub.s32 16, 1
                loop: start=0, step=1, limit=1
                $region92: #{_lambda_.1} parent=83 // loop_pre_header
                  _
                $region93: #{_lambda_.1} parent=83 // loop_header
                  %s346 = sphi 0, %s350
                  %p347 = scmp.ge.s32.totalorder %s346, 1
                  %s351 = sphi %s284, %s284
                  %s352 = sphi %s279, %s279
                $region94: #{_lambda_.1} parent=83 // loop_header_branch
                  %349 = sbr.rel (%p347) target = $region98
                $region95: #{_lambda_.1} parent=83 // loop_body
                  %v353 = vld [vmem:[%s351] sm:%s344]
                  %354 = vst [vmem:[%s352] sm:%s344] %v353
                  %v355 = vld [vmem:[%s351 + $0x8] sm:%s344]
                  %356 = vst [vmem:[%s352 + $0x4] sm:%s344] %v355
                  %v357 = vld [vmem:[%s351 + $0x10] sm:%s344]
                  %358 = vst [vmem:[%s352 + $0x8] sm:%s344] %v357
                  %v359 = vld [vmem:[%s351 + $0x18] sm:%s344]
                  %360 = vst [vmem:[%s352 + $0xc] sm:%s344] %v359
                  %v361 = vld [vmem:[%s351 + $0x20] sm:%s344]
                  %362 = vst [vmem:[%s352 + $0x10] sm:%s344] %v361
                  %v363 = vld [vmem:[%s351 + $0x28] sm:%s344]
                  %364 = vst [vmem:[%s352 + $0x14] sm:%s344] %v363
                  %v365 = vld [vmem:[%s351 + $0x30] sm:%s344]
                  %366 = vst [vmem:[%s352 + $0x18] sm:%s344] %v365
                  %v367 = vld [vmem:[%s351 + $0x38] sm:%s344]
                  %368 = vst [vmem:[%s352 + $0x1c] sm:%s344] %v367
                  %v369 = vld [vmem:[%s351 + $0x40] sm:%s344]
                  %370 = vst [vmem:[%s352 + $0x20] sm:%s344] %v369
                  %v371 = vld [vmem:[%s351 + $0x48] sm:%s344]
                  %372 = vst [vmem:[%s352 + $0x24] sm:%s344] %v371
                  %v373 = vld [vmem:[%s351 + $0x50] sm:%s344]
                  %374 = vst [vmem:[%s352 + $0x28] sm:%s344] %v373
                  %v375 = vld [vmem:[%s351 + $0x58] sm:%s344]
                  %376 = vst [vmem:[%s352 + $0x2c] sm:%s344] %v375
                  %v377 = vld [vmem:[%s351 + $0x60] sm:%s344]
                  %378 = vst [vmem:[%s352 + $0x30] sm:%s344] %v377
                  %v379 = vld [vmem:[%s351 + $0x68] sm:%s344]
                  %380 = vst [vmem:[%s352 + $0x34] sm:%s344] %v379
                  %v381 = vld [vmem:[%s351 + $0x70] sm:%s344]
                  %382 = vst [vmem:[%s352 + $0x38] sm:%s344] %v381
                  %v383 = vld [vmem:[%s351 + $0x78] sm:%s344]
                  %384 = vst [vmem:[%s352 + $0x3c] sm:%s344] %v383
                $region96: #{_lambda_.1} parent=83 // loop_footer
                  %s350 = sadd.s32 1, %s346
                $region97: #{_lambda_.1} parent=83 // loop_footer_branch
                  %345 = sbr.rel target = $region93
                $region98: #{_lambda_.1} parent=83 // loop_exit
                  _
              $region84: #{_lambda_.1} parent=68 // pred_fallthru
                _
            $region69: #{_lambda_.1} parent=64 // pred_fallthru
              _
            // Predicated region
            $region70: #{_lambda_.1} parent=64 // pred_check
              _
            $region71: #{_lambda_.1} parent=64 // pred_check_branch
              %290 = sbr.rel (0) target = $region73
            $region72: #{_lambda_.1} parent=64 // pred_region
              %s292 = ssub.s32 16, 1
              loop: start=0, step=1, limit=1
              $region74: #{_lambda_.1} parent=72 // loop_pre_header
                _
              $region75: #{_lambda_.1} parent=72 // loop_header
                %s294 = sphi 0, %s298
                %p295 = scmp.ge.s32.totalorder %s294, 1
                %s299 = sphi %s284, %s284
                %s300 = sphi %s279, %s279
              $region76: #{_lambda_.1} parent=72 // loop_header_branch
                %297 = sbr.rel (%p295) target = $region80
              $region77: #{_lambda_.1} parent=72 // loop_body
                %v301 = vld [vmem:[%s299] sm:%s292]
                %302 = vst [vmem:[%s300] sm:%s292] %v301
                %v303 = vld [vmem:[%s299 + $0x8] sm:%s292]
                %304 = vst [vmem:[%s300 + $0x4] sm:%s292] %v303
                %v305 = vld [vmem:[%s299 + $0x10] sm:%s292]
                %306 = vst [vmem:[%s300 + $0x8] sm:%s292] %v305
                %v307 = vld [vmem:[%s299 + $0x18] sm:%s292]
                %308 = vst [vmem:[%s300 + $0xc] sm:%s292] %v307
                %v309 = vld [vmem:[%s299 + $0x20] sm:%s292]
                %310 = vst [vmem:[%s300 + $0x10] sm:%s292] %v309
                %v311 = vld [vmem:[%s299 + $0x28] sm:%s292]
                %312 = vst [vmem:[%s300 + $0x14] sm:%s292] %v311
                %v313 = vld [vmem:[%s299 + $0x30] sm:%s292]
                %314 = vst [vmem:[%s300 + $0x18] sm:%s292] %v313
                %v315 = vld [vmem:[%s299 + $0x38] sm:%s292]
                %316 = vst [vmem:[%s300 + $0x1c] sm:%s292] %v315
                %v317 = vld [vmem:[%s299 + $0x40] sm:%s292]
                %318 = vst [vmem:[%s300 + $0x20] sm:%s292] %v317
                %v319 = vld [vmem:[%s299 + $0x48] sm:%s292]
                %320 = vst [vmem:[%s300 + $0x24] sm:%s292] %v319
                %v321 = vld [vmem:[%s299 + $0x50] sm:%s292]
                %322 = vst [vmem:[%s300 + $0x28] sm:%s292] %v321
                %v323 = vld [vmem:[%s299 + $0x58] sm:%s292]
                %324 = vst [vmem:[%s300 + $0x2c] sm:%s292] %v323
                %v325 = vld [vmem:[%s299 + $0x60] sm:%s292]
                %326 = vst [vmem:[%s300 + $0x30] sm:%s292] %v325
                %v327 = vld [vmem:[%s299 + $0x68] sm:%s292]
                %328 = vst [vmem:[%s300 + $0x34] sm:%s292] %v327
                %v329 = vld [vmem:[%s299 + $0x70] sm:%s292]
                %330 = vst [vmem:[%s300 + $0x38] sm:%s292] %v329
                %v331 = vld [vmem:[%s299 + $0x78] sm:%s292]
                %332 = vst [vmem:[%s300 + $0x3c] sm:%s292] %v331
              $region78: #{_lambda_.1} parent=72 // loop_footer
                %s298 = sadd.s32 1, %s294
              $region79: #{_lambda_.1} parent=72 // loop_footer_branch
                %293 = sbr.rel target = $region75
              $region80: #{_lambda_.1} parent=72 // loop_exit
                _
            $region73: #{_lambda_.1} parent=64 // pred_fallthru
              _
          $region65: #{_lambda_.1} parent=60 // pred_fallthru
            _
          %385 = vnop
        $region61: #{_lambda_.1} parent=15 // pred_fallthru
          _
        // Predicated region
        $region99: #{_lambda_.1} parent=15 // pred_check
          %p386 = pneg %p107
        $region100: #{_lambda_.1} parent=15 // pred_check_branch
          %388 = sbr.rel (%p386) target = $region102
        $region101: #{_lambda_.1} parent=15 // pred_region
          %p389 = scmp.lt.s32.totalorder %s20, 1
          %s390 = scalar_select %p389, %s20, 1
          %s391 = scalar_lea.vmem %s2, %s390
        $region102: #{_lambda_.1} parent=15 // pred_fallthru
          _
      $region16: #{_lambda_.1} parent=5 // pred_fallthru
        _
      %p392 = scmp.le.s32.totalorder 1, %s12
      %p393 = scmp.lt.s32.totalorder %s12, 13
      %p394 = pnand %p392, %p393
      %p395 = pneg %p394
      // Predicated region
      $region103: #{_lambda_.1} parent=5 // pred_check
        _
      $region104: #{_lambda_.1} parent=5 // pred_check_branch
        %397 = sbr.rel (%p394) target = $region106
      $region105: #{_lambda_.1} parent=5 // pred_region
        %s398 = ssub.s32 %s12, 1
        %s399 = sand.u32 %s46, 1
        %s400 = sand.u32 %s46, 1
        %s401 = smul.addr %s400, 64
        %s402 = scalar_lea.vmem [#allocation3], %s401
        // Predicated region
        $region107: #{_lambda_.1} parent=105 // pred_check
          %p403 = pneg %p59
        $region108: #{_lambda_.1} parent=105 // pred_check_branch
          %405 = sbr.rel (%p403) target = $region110
        $region109: #{_lambda_.1} parent=105 // pred_region
          _
        $region110: #{_lambda_.1} parent=105 // pred_fallthru
          _
        %s406 = sand.u32 %s74, 1
        %s407 = sand.u32 %s74, 1
        %s408 = smul.addr %s407, 64
        %s409 = scalar_lea.vmem [#allocation4], %s408
        // Predicated region
        $region111: #{_lambda_.1} parent=105 // pred_check
          %p410 = pneg %p87
        $region112: #{_lambda_.1} parent=105 // pred_check_branch
          %412 = sbr.rel (%p410) target = $region114
        $region113: #{_lambda_.1} parent=105 // pred_region
          _
        $region114: #{_lambda_.1} parent=105 // pred_fallthru
          _
        %s413 = sand.u32 %s46, 1
        %s414 = sand.u32 %s46, 1
        %s415 = smul.addr %s414, 64
        %s416 = scalar_lea.vmem [#allocation3], %s415
        %p417 = pneg %p59
        %p418 = pneg %p56
        %s419 = sand.u32 %s74, 1
        %s420 = sand.u32 %s74, 1
        %s421 = smul.addr %s420, 64
        %s422 = scalar_lea.vmem [#allocation4], %s421
        %p423 = pneg %p87
        %p424 = pneg %p84
        %p425 = scmp.lt.s32.totalorder %s23, 1
        %s426 = scalar_select %p425, %s23, 1
        %s427 = scalar_lea.vmem %s2, %s426
        %p428 = pneg %p113
        %p429 = pneg %p110
        %p430 = pneg %p141
        %p431 = pneg %p138
        %s432 = sand.u32 %s128, 1
        %s433 = scalar_lea.sflag [#allocation6], %s432
        %s434 = sand.u32 %s128, 1
        %s435 = smul.addr %s434, 128
        %s436 = scalar_lea.vmem [#allocation5], %s435
        %s437 = smul.u32 16, %s22
        %s438 = smul.u32 16, %s24
        %p439 = scmp.lt.s32.totalorder %s23, 1
        %s440 = scalar_select %p439, %s23, 1
        %s441 = scalar_lea.vmem %s2, %s440
        %s442 = smul.u32 16, %s22
        %p443 = scmp.eq.s32.totalorder %s24, 0
        // Predicated region
        $region115: #{_lambda_.1} parent=105 // pred_check
          %p444 = pneg %p443
        $region116: #{_lambda_.1} parent=105 // pred_check_branch
          %446 = sbr.rel (%p444) target = $region118
        $region117: #{_lambda_.1} parent=105 // pred_region
          %447 = vst [vmem:[#allocation2] sm:$0xff] 0.0
          %448 = vst [vmem:[#allocation2 + $0x8] sm:$0xff] 0.0
          %449 = vst [vmem:[#allocation2 + $0x10] sm:$0xff] 0.0
          %450 = vst [vmem:[#allocation2 + $0x18] sm:$0xff] 0.0
          %451 = vst [vmem:[#allocation2 + $0x20] sm:$0xff] 0.0
          %452 = vst [vmem:[#allocation2 + $0x28] sm:$0xff] 0.0
          %453 = vst [vmem:[#allocation2 + $0x30] sm:$0xff] 0.0
          %454 = vst [vmem:[#allocation2 + $0x38] sm:$0xff] 0.0
          %455 = vst [vmem:[#allocation2 + $0x40] sm:$0xff] 0.0
          %456 = vst [vmem:[#allocation2 + $0x48] sm:$0xff] 0.0
          %457 = vst [vmem:[#allocation2 + $0x50] sm:$0xff] 0.0
          %458 = vst [vmem:[#allocation2 + $0x58] sm:$0xff] 0.0
          %459 = vst [vmem:[#allocation2 + $0x60] sm:$0xff] 0.0
          %460 = vst [vmem:[#allocation2 + $0x68] sm:$0xff] 0.0
          %461 = vst [vmem:[#allocation2 + $0x70] sm:$0xff] 0.0
          %462 = vst [vmem:[#allocation2 + $0x78] sm:$0xff] 0.0
        $region118: #{_lambda_.1} parent=105 // pred_fallthru
          _
        %v463 = vld [vmem:[#allocation2] sm:$0xff]
        %v464 = vld [vmem:[#allocation2 + $0x8] sm:$0xff]
        %v465 = vld [vmem:[#allocation2 + $0x10] sm:$0xff]
        %v466 = vld [vmem:[#allocation2 + $0x18] sm:$0xff]
        %v467 = vld [vmem:[#allocation2 + $0x20] sm:$0xff]
        %v468 = vld [vmem:[#allocation2 + $0x28] sm:$0xff]
        %v469 = vld [vmem:[#allocation2 + $0x30] sm:$0xff]
        %v470 = vld [vmem:[#allocation2 + $0x38] sm:$0xff]
        %v471 = vld [vmem:[#allocation2 + $0x40] sm:$0xff]
        %v472 = vld [vmem:[#allocation2 + $0x48] sm:$0xff]
        %v473 = vld [vmem:[#allocation2 + $0x50] sm:$0xff]
        %v474 = vld [vmem:[#allocation2 + $0x58] sm:$0xff]
        %v475 = vld [vmem:[#allocation2 + $0x60] sm:$0xff]
        %v476 = vld [vmem:[#allocation2 + $0x68] sm:$0xff]
        %v477 = vld [vmem:[#allocation2 + $0x70] sm:$0xff]
        %v478 = vld [vmem:[#allocation2 + $0x78] sm:$0xff]
        %v479 = vld [vmem:[%s402] sm:$0xf]
        %v480 = vld [vmem:[%s402 + $0x4] sm:$0xf]
        %v481 = vld [vmem:[%s402 + $0x8] sm:$0xf]
        %v482 = vld [vmem:[%s402 + $0xc] sm:$0xf]
        %v483 = vld [vmem:[%s402 + $0x10] sm:$0xf]
        %v484 = vld [vmem:[%s402 + $0x14] sm:$0xf]
        %v485 = vld [vmem:[%s402 + $0x18] sm:$0xf]
        %v486 = vld [vmem:[%s402 + $0x1c] sm:$0xf]
        %v487 = vld [vmem:[%s402 + $0x20] sm:$0xf]
        %v488 = vld [vmem:[%s402 + $0x24] sm:$0xf]
        %v489 = vld [vmem:[%s402 + $0x28] sm:$0xf]
        %v490 = vld [vmem:[%s402 + $0x2c] sm:$0xf]
        %v491 = vld [vmem:[%s402 + $0x30] sm:$0xf]
        %v492 = vld [vmem:[%s402 + $0x34] sm:$0xf]
        %v493 = vld [vmem:[%s402 + $0x38] sm:$0xf]
        %v494 = vld [vmem:[%s402 + $0x3c] sm:$0xf]
        %v495 = vld [vmem:[%s409] sm:$0xf]
        %v496 = vld [vmem:[%s409 + $0x4] sm:$0xf]
        %v497 = vld [vmem:[%s409 + $0x8] sm:$0xf]
        %v498 = vld [vmem:[%s409 + $0xc] sm:$0xf]
        %v499 = vld [vmem:[%s409 + $0x10] sm:$0xf]
        %v500 = vld [vmem:[%s409 + $0x14] sm:$0xf]
        %v501 = vld [vmem:[%s409 + $0x18] sm:$0xf]
        %v502 = vld [vmem:[%s409 + $0x1c] sm:$0xf]
        %v503 = vld [vmem:[%s409 + $0x20] sm:$0xf]
        %v504 = vld [vmem:[%s409 + $0x24] sm:$0xf]
        %v505 = vld [vmem:[%s409 + $0x28] sm:$0xf]
        %v506 = vld [vmem:[%s409 + $0x2c] sm:$0xf]
        %v507 = vld [vmem:[%s409 + $0x30] sm:$0xf]
        %v508 = vld [vmem:[%s409 + $0x34] sm:$0xf]
        %v509 = vld [vmem:[%s409 + $0x38] sm:$0xf]
        %v510 = vld [vmem:[%s409 + $0x3c] sm:$0xf]
        %v527 = vunpack.c.l.b16 %v479
        %v528 = vunpack.c.l.b16 %v480
        %v529 = vunpack.c.l.b16 %v481
        %v530 = vunpack.c.l.b16 %v482
        %v531 = vunpack.c.l.b16 %v483
        %v532 = vunpack.c.l.b16 %v484
        %v533 = vunpack.c.l.b16 %v485
        %v534 = vunpack.c.l.b16 %v486
        %v535 = vunpack.c.l.b16 %v487
        %v536 = vunpack.c.l.b16 %v488
        %v537 = vunpack.c.l.b16 %v489
        %v538 = vunpack.c.l.b16 %v490
        %v539 = vunpack.c.l.b16 %v491
        %v540 = vunpack.c.l.b16 %v492
        %v541 = vunpack.c.l.b16 %v493
        %v542 = vunpack.c.l.b16 %v494
        %v543 = vpack.c.b16 %v528, %v527
        %v544 = vpack.c.b16 %v530, %v529
        %v545 = vpack.c.b16 %v532, %v531
        %v546 = vpack.c.b16 %v534, %v533
        %v547 = vpack.c.b16 %v536, %v535
        %v548 = vpack.c.b16 %v538, %v537
        %v549 = vpack.c.b16 %v540, %v539
        %v550 = vpack.c.b16 %v542, %v541
        %v575 = vunpack.c.l.b16 %v495
        %v576 = vunpack.c.l.b16 %v496
        %v577 = vunpack.c.l.b16 %v497
        %v578 = vunpack.c.l.b16 %v498
        %v579 = vunpack.c.l.b16 %v499
        %v580 = vunpack.c.l.b16 %v500
        %v581 = vunpack.c.l.b16 %v501
        %v582 = vunpack.c.l.b16 %v502
        %v583 = vunpack.c.l.b16 %v503
        %v584 = vunpack.c.l.b16 %v504
        %v585 = vunpack.c.l.b16 %v505
        %v586 = vunpack.c.l.b16 %v506
        %v587 = vunpack.c.l.b16 %v507
        %v588 = vunpack.c.l.b16 %v508
        %v589 = vunpack.c.l.b16 %v509
        %v590 = vunpack.c.l.b16 %v510
        %v591 = vpack.c.b16 %v576, %v575
        %v592 = vpack.c.b16 %v578, %v577
        %v593 = vpack.c.b16 %v580, %v579
        %v594 = vpack.c.b16 %v582, %v581
        %v595 = vpack.c.b16 %v584, %v583
        %v596 = vpack.c.b16 %v586, %v585
        %v597 = vpack.c.b16 %v588, %v587
        %v598 = vpack.c.b16 %v590, %v589
        %607 = vmatpush.bf16.msra.mxu0 %v598
        %608 = vmatpush.bf16.msra.mxu0 %v597
        %609 = vmatpush.bf16.msra.mxu0 %v596
        %610 = vmatpush.bf16.msra.mxu0 %v595
        %611 = vmatpush.bf16.msra.mxu0 %v594
        %612 = vmatpush.bf16.msra.mxu0 %v593
        %613 = vmatpush.bf16.msra.mxu0 %v592
        %614 = vmatpush.bf16.msra.mxu0 %v591
        %615 = vmatmul.bf16.gmra.mxu0 %v543
        %v616 = vpop.f32.mrf.mxu0
        %v617 = vadd.f32 0.0, %v616
        %v618 = vpop.f32.mrf.mxu0
        %v619 = vadd.f32 0.0, %v618
        %620 = vmatmul.bf16.gmra.mxu0 %v544
        %v621 = vpop.f32.mrf.mxu0
        %v622 = vadd.f32 0.0, %v621
        %v623 = vpop.f32.mrf.mxu0
        %v624 = vadd.f32 0.0, %v623
        %625 = vmatmul.bf16.gmra.mxu0 %v545
        %v626 = vpop.f32.mrf.mxu0
        %v627 = vadd.f32 0.0, %v626
        %v628 = vpop.f32.mrf.mxu0
        %v629 = vadd.f32 0.0, %v628
        %630 = vmatmul.bf16.gmra.mxu0 %v546
        %v631 = vpop.f32.mrf.mxu0
        %v632 = vadd.f32 0.0, %v631
        %v633 = vpop.f32.mrf.mxu0
        %v634 = vadd.f32 0.0, %v633
        %635 = vmatmul.bf16.gmra.mxu0 %v547
        %v636 = vpop.f32.mrf.mxu0
        %v637 = vadd.f32 0.0, %v636
        %v638 = vpop.f32.mrf.mxu0
        %v639 = vadd.f32 0.0, %v638
        %640 = vmatmul.bf16.gmra.mxu0 %v548
        %v641 = vpop.f32.mrf.mxu0
        %v642 = vadd.f32 0.0, %v641
        %v643 = vpop.f32.mrf.mxu0
        %v644 = vadd.f32 0.0, %v643
        %645 = vmatmul.bf16.gmra.mxu0 %v549
        %v646 = vpop.f32.mrf.mxu0
        %v647 = vadd.f32 0.0, %v646
        %v648 = vpop.f32.mrf.mxu0
        %v649 = vadd.f32 0.0, %v648
        %650 = vmatmul.bf16.gmra.mxu0 %v550
        %v651 = vpop.f32.mrf.mxu0
        %v652 = vadd.f32 0.0, %v651
        %v653 = vpop.f32.mrf.mxu0
        %v654 = vadd.f32 0.0, %v653
        %655 = vdwg.mxu0
        %v656 = vadd.f32 %v463, %v617
        %v657 = vadd.f32 %v464, %v619
        %v658 = vadd.f32 %v465, %v622
        %v659 = vadd.f32 %v466, %v624
        %v660 = vadd.f32 %v467, %v627
        %v661 = vadd.f32 %v468, %v629
        %v662 = vadd.f32 %v469, %v632
        %v663 = vadd.f32 %v470, %v634
        %v664 = vadd.f32 %v471, %v637
        %v665 = vadd.f32 %v472, %v639
        %v666 = vadd.f32 %v473, %v642
        %v667 = vadd.f32 %v474, %v644
        %v668 = vadd.f32 %v475, %v647
        %v669 = vadd.f32 %v476, %v649
        %v670 = vadd.f32 %v477, %v652
        %v671 = vadd.f32 %v478, %v654
        %672 = vst [vmem:[#allocation2] sm:$0xff] %v656
        %673 = vst [vmem:[#allocation2 + $0x8] sm:$0xff] %v657
        %674 = vst [vmem:[#allocation2 + $0x10] sm:$0xff] %v658
        %675 = vst [vmem:[#allocation2 + $0x18] sm:$0xff] %v659
        %676 = vst [vmem:[#allocation2 + $0x20] sm:$0xff] %v660
        %677 = vst [vmem:[#allocation2 + $0x28] sm:$0xff] %v661
        %678 = vst [vmem:[#allocation2 + $0x30] sm:$0xff] %v662
        %679 = vst [vmem:[#allocation2 + $0x38] sm:$0xff] %v663
        %680 = vst [vmem:[#allocation2 + $0x40] sm:$0xff] %v664
        %681 = vst [vmem:[#allocation2 + $0x48] sm:$0xff] %v665
        %682 = vst [vmem:[#allocation2 + $0x50] sm:$0xff] %v666
        %683 = vst [vmem:[#allocation2 + $0x58] sm:$0xff] %v667
        %684 = vst [vmem:[#allocation2 + $0x60] sm:$0xff] %v668
        %685 = vst [vmem:[#allocation2 + $0x68] sm:$0xff] %v669
        %686 = vst [vmem:[#allocation2 + $0x70] sm:$0xff] %v670
        %687 = vst [vmem:[#allocation2 + $0x78] sm:$0xff] %v671
        %p688 = scmp.eq.s32.totalorder %s24, 2
        // Predicated region
        $region119: #{_lambda_.1} parent=105 // pred_check
          %p689 = pneg %p688
        $region120: #{_lambda_.1} parent=105 // pred_check_branch
          %691 = sbr.rel (%p689) target = $region122
        $region121: #{_lambda_.1} parent=105 // pred_region
          %v692 = vld [vmem:[#allocation2] sm:$0xff]
          %v693 = vld [vmem:[#allocation2 + $0x8] sm:$0xff]
          %v694 = vld [vmem:[#allocation2 + $0x10] sm:$0xff]
          %v695 = vld [vmem:[#allocation2 + $0x18] sm:$0xff]
          %v696 = vld [vmem:[#allocation2 + $0x20] sm:$0xff]
          %v697 = vld [vmem:[#allocation2 + $0x28] sm:$0xff]
          %v698 = vld [vmem:[#allocation2 + $0x30] sm:$0xff]
          %v699 = vld [vmem:[#allocation2 + $0x38] sm:$0xff]
          %v700 = vld [vmem:[#allocation2 + $0x40] sm:$0xff]
          %v701 = vld [vmem:[#allocation2 + $0x48] sm:$0xff]
          %v702 = vld [vmem:[#allocation2 + $0x50] sm:$0xff]
          %v703 = vld [vmem:[#allocation2 + $0x58] sm:$0xff]
          %v704 = vld [vmem:[#allocation2 + $0x60] sm:$0xff]
          %v705 = vld [vmem:[#allocation2 + $0x68] sm:$0xff]
          %v706 = vld [vmem:[#allocation2 + $0x70] sm:$0xff]
          %v707 = vld [vmem:[#allocation2 + $0x78] sm:$0xff]
          %v708 = vld [vmem:[%s441] sm:$0x1]
          %v710 = vperm.slane %v708, 0
          %v712 = vadd.f32 %v692, %v710
          %v713 = vadd.f32 %v693, %v710
          %v714 = vadd.f32 %v694, %v710
          %v715 = vadd.f32 %v695, %v710
          %v716 = vadd.f32 %v696, %v710
          %v717 = vadd.f32 %v697, %v710
          %v718 = vadd.f32 %v698, %v710
          %v719 = vadd.f32 %v699, %v710
          %v720 = vadd.f32 %v700, %v710
          %v721 = vadd.f32 %v701, %v710
          %v722 = vadd.f32 %v702, %v710
          %v723 = vadd.f32 %v703, %v710
          %v724 = vadd.f32 %v704, %v710
          %v725 = vadd.f32 %v705, %v710
          %v726 = vadd.f32 %v706, %v710
          %v727 = vadd.f32 %v707, %v710
          %728 = vst [vmem:[%s436] sm:$0xff] %v712
          %729 = vst [vmem:[%s436 + $0x8] sm:$0xff] %v713
          %730 = vst [vmem:[%s436 + $0x10] sm:$0xff] %v714
          %731 = vst [vmem:[%s436 + $0x18] sm:$0xff] %v715
          %732 = vst [vmem:[%s436 + $0x20] sm:$0xff] %v716
          %733 = vst [vmem:[%s436 + $0x28] sm:$0xff] %v717
          %734 = vst [vmem:[%s436 + $0x30] sm:$0xff] %v718
          %735 = vst [vmem:[%s436 + $0x38] sm:$0xff] %v719
          %736 = vst [vmem:[%s436 + $0x40] sm:$0xff] %v720
          %737 = vst [vmem:[%s436 + $0x48] sm:$0xff] %v721
          %738 = vst [vmem:[%s436 + $0x50] sm:$0xff] %v722
          %739 = vst [vmem:[%s436 + $0x58] sm:$0xff] %v723
          %740 = vst [vmem:[%s436 + $0x60] sm:$0xff] %v724
          %741 = vst [vmem:[%s436 + $0x68] sm:$0xff] %v725
          %742 = vst [vmem:[%s436 + $0x70] sm:$0xff] %v726
          %743 = vst [vmem:[%s436 + $0x78] sm:$0xff] %v727
        $region122: #{_lambda_.1} parent=105 // pred_fallthru
          _
        %s744 = sand.u32 %s128, 1
        %s745 = scalar_lea.sflag [#allocation6], %s744
        %s746 = sand.u32 %s128, 1
        %s747 = smul.addr %s746, 128
        %s748 = scalar_lea.vmem [#allocation5], %s747
        // Predicated region
        $region123: #{_lambda_.1} parent=105 // pred_check
          %p749 = pneg %p138
        $region124: #{_lambda_.1} parent=105 // pred_check_branch
          %751 = sbr.rel (%p749) target = $region126
        $region125: #{_lambda_.1} parent=105 // pred_region
          %s752 = smul.u32 16, %s22
          %754 = vsyncadd %s745, 0
          %s755 = smul.addr %s752, 2
          %s756 = sadd.s32 %s23, %s755
          %s757 = smul.addr %s756, 8
          %s758 = scalar_lea.hbm %s3, %s757
          %s759 = sshll.u32 %s748, 4
          %s760 = int_to_ptr.vmem [resolvable:$true] %s759
          %s761 = sshll.u32 %s758, 4
          %s762 = int_to_ptr.hbm [resolvable:$true] %s761
          %767 = dma.vmem_to_hbm [thread:$0]  %s760, 2048, %s762, %s745, 128, 256, 8
        $region126: #{_lambda_.1} parent=105 // pred_fallthru
          _
      $region106: #{_lambda_.1} parent=5 // pred_fallthru
        _
      %p768 = scmp.le.s32.totalorder 2, %s12
      // Predicated region
      $region127: #{_lambda_.1} parent=5 // pred_check
        %p769 = pneg %p768
      $region128: #{_lambda_.1} parent=5 // pred_check_branch
        %771 = sbr.rel (%p769) target = $region130
      $region129: #{_lambda_.1} parent=5 // pred_region
        %s772 = ssub.s32 %s12, 2
        // Predicated region
        $region131: #{_lambda_.1} parent=129 // pred_check
          %p773 = pneg %p144
        $region132: #{_lambda_.1} parent=129 // pred_check_branch
          %775 = sbr.rel (%p773) target = $region134
        $region133: #{_lambda_.1} parent=129 // pred_region
          %s776 = sand.u32 %s129, 1
          %s777 = scalar_lea.sflag [#allocation6], %s776
          %s778 = sand.u32 %s129, 1
          %s779 = smul.addr %s778, 128
          %s780 = scalar_lea.vmem [#allocation5], %s779
          %782 = dma.done %s777, 2048
        $region134: #{_lambda_.1} parent=129 // pred_fallthru
          _
      $region130: #{_lambda_.1} parent=5 // pred_fallthru
        _
    $region6: #{_lambda_.1} parent=1 // loop_footer
      %s16 = sadd.s32 1, %s12
    $region7: #{_lambda_.1} parent=1 // loop_footer_branch
      %11 = sbr.rel target = $region3
    $region8: #{_lambda_.1} parent=1 // loop_exit
      _
    %783 = vsyncpa [#allocation6], 1
    %s784 = scalar_lea.sflag [#allocation6], 1
    %785 = vsyncpa %s784, 1

</llo_original>
